<compile_context>
chip_gen: v7x
topology: tpu7x:2x2x1
jax: 0.10.0
libtpu: 0.0.40
codegen_flags: <defaults>
</compile_context>

<pallas_src>
import functools

import jax
import jax.numpy as jnp
import numpy as np
from jax.experimental import pallas as pl
from jax.experimental.pallas import tpu as pltpu

_LANE = 128
_SUBLANE = 8
_TARGET_BLOCK_BYTES = 1 << 20      # ~1 MiB of I/O per grid block, any dtype


def _round_up(v, m):
    return -(-v // m) * m


def _quantize_kernel(scale_ref, inv_scale_ref, zp_ref, x_ref, o_ref,
                     *, quant_min, quant_max):
    # scale / inv_scale / zero_point are (1,) f32 scalars in SMEM ('L' q_level)
    scale = scale_ref[0]
    inv_scale = inv_scale_ref[0]
    zp = zp_ref[0]

    # Upcast inside the kernel (HBM I/O stays in the original dtype).
    x = x_ref[...].astype(jnp.float32) * inv_scale - zp

    # Round half away from zero == sign(x) * floor(|x| + 0.5).
    # Branch-free: compute the non-negative magnitude, then transfer x's sign
    # bit onto it (bitcasts are free; avoids evaluating floor AND ceil paths).
    mag = jnp.floor(jnp.abs(x) + 0.5)                       # >= 0, sign bit 0
    sign_bit = pltpu.bitcast(x, jnp.uint32) & jnp.uint32(0x80000000)
    rounded = pltpu.bitcast(pltpu.bitcast(mag, jnp.uint32) | sign_bit,
                            jnp.float32)

    clamped = jnp.clip(rounded, quant_min, quant_max)
    o_ref[...] = ((clamped + zp) * scale).astype(o_ref.dtype)


def quantizer_forward(x, scale, zero_point, *, bits=8):
    """Quantizer.forward for layer-wise ('L') quantization, inference path."""
    if bits == 32:
        return x
    assert bits != 1, "Binary quantization is not supported"

    quant_min = float(-(1 << (bits - 1)))      # e.g. -128 for 8 bits
    quant_max = float((1 << (bits - 1)) - 1)   # e.g.  127 for 8 bits

    orig_shape = x.shape
    dtype = x.dtype
    n = int(np.prod(orig_shape))

    flat = x.reshape(-1)
    padded = False
    if n % _LANE == 0:
        # Fast path (typical NCHW activations): free reshape, zero extra HBM
        # traffic; a partial last grid block is masked by Pallas.
        rows = n // _LANE
    else:
        # Rare unaligned path: one minimal pad to the 8x128 layout grain.
        rows = _round_up(-(-n // _LANE), _SUBLANE)
        flat = jnp.pad(flat, (0, rows * _LANE - n))
        padded = True
    x2d = flat.reshape(rows, _LANE)

    # Dtype-aware tile: keep ~_TARGET_BLOCK_BYTES per block (2048 rows f32,
    # 4096 bf16, 8192 int8).  Medium tensors get a single maximal block.
    bytes_per_elem = jnp.dtype(dtype).itemsize
    max_rows = max(_SUBLANE,
                   (_TARGET_BLOCK_BYTES // (_LANE * bytes_per_elem))
                   // _SUBLANE * _SUBLANE)
    if rows <= max_rows:
        row_tile = rows                     # one block; shape == full array dims
    else:
        row_tile = max_rows                 # (8,128)-aligned; tail block masked
    grid = (-(-rows // row_tile),)

    # Hoist the divide: scalar reciprocal computed once in the wrapper
    # (scale > 0 is guaranteed by the observer / eps clamp).
    scale_f32 = scale.reshape(-1).astype(jnp.float32)
    zp_f32 = zero_point.reshape(-1).astype(jnp.float32)
    inv_scale = 1.0 / scale_f32

    kernel = functools.partial(
        _quantize_kernel, quant_min=quant_min, quant_max=quant_max
    )

    out2d = pl.pallas_call(
        kernel,
        out_shape=jax.ShapeDtypeStruct((rows, _LANE), dtype),
        grid=grid,
        in_specs=[
            pl.BlockSpec(memory_space=pltpu.SMEM),   # scale      (1,)
            pl.BlockSpec(memory_space=pltpu.SMEM),   # inv_scale  (1,)
            pl.BlockSpec(memory_space=pltpu.SMEM),   # zero_point (1,)
            pl.BlockSpec((row_tile, _LANE), lambda i: (i, 0)),
        ],
        out_specs=pl.BlockSpec((row_tile, _LANE), lambda i: (i, 0)),
        compiler_params=pltpu.CompilerParams(
            dimension_semantics=("parallel",),
        ),
    )(scale_f32, inv_scale, zp_f32, x2d)

    out_flat = out2d.reshape(-1)
    if padded:
        out_flat = out_flat[:n]
    return out_flat.reshape(orig_shape)


def _reference_forward(x, scale, zero_point, *, bits=8):
    quant_min = np.float32(-(1 << (bits - 1)))
    quant_max = np.float32((1 << (bits - 1)) - 1)
    s = np.float32(scale[0])
    zp = np.float32(zero_point[0])
    t = (x / s - zp).astype(np.float32)
    r = np.sign(t) * np.floor(np.abs(t) + np.float32(0.5))
    return ((np.clip(r, quant_min, quant_max) + zp) * s).astype(np.float32)


if __name__ == "__main__":
    key = jax.random.PRNGKey(0)
    k1, k2 = jax.random.split(key)

    # NCHW activation, small shape (aligned fast path: 2*4*16*16 = 2048 elems)
    x = jax.random.normal(k1, (2, 4, 16, 16), dtype=jnp.float32) * 3.0
    # Buffers as registered in Quantizer.__init__ for q_level == 'L'
    # (representative post-calibration qparams; power-of-two scale so the
    # reciprocal-multiply path matches the reference division bit-exactly).
    scale = jnp.ones((1,), dtype=jnp.float32) * 0.0625
    zero_point = jnp.zeros((1,), dtype=jnp.float32)

    out = jax.block_until_ready(quantizer_forward(x, scale, zero_point, bits=8))
    ref = _reference_forward(np.asarray(x), np.asarray(scale),
                             np.asarray(zero_point), bits=8)
    np.testing.assert_allclose(np.asarray(out), ref, rtol=1e-6, atol=1e-6)

    # Unaligned shape (105 elems) + non-zero integral zero_point: exercises the
    # padded fallback path and the zp handling.
    x_u = jax.random.normal(k2, (3, 5, 7), dtype=jnp.float32) * 2.0
    zp_u = jnp.full((1,), 3.0, dtype=jnp.float32)
    out_u = jax.block_until_ready(quantizer_forward(x_u, scale, zp_u, bits=8))
    ref_u = _reference_forward(np.asarray(x_u), np.asarray(scale),
                               np.asarray(zp_u), bits=8)
    np.testing.assert_allclose(np.asarray(out_u), ref_u, rtol=1e-6, atol=1e-6)

    print("KERNEL_OK")
</pallas_src>

<mosaic_0001>
module attributes {stable_mosaic.version = 11 : i64} {
  func.func @_quantize_kernel(%arg0: i32, %arg1: memref<1xf32, #tpu.memory_space<smem>>, %arg2: memref<1xf32, #tpu.memory_space<smem>>, %arg3: memref<1xf32, #tpu.memory_space<smem>>, %arg4: memref<16x128xf32, #tpu.memory_space<vmem>>, %arg5: memref<16x128xf32, #tpu.memory_space<vmem>>) attributes {dimension_semantics = [#tpu.dimension_semantics<parallel>], iteration_bounds = array<i64: 1>, scalar_prefetch = 0 : i64, scratch_operands = 0 : i64, tpu.core_type = #tpu.core_type<tc>, window_params = [{transform_indices = @transform_0, window_bounds = array<i64: 1>}, {transform_indices = @transform_1, window_bounds = array<i64: 1>}, {transform_indices = @transform_2, window_bounds = array<i64: 1>}, {transform_indices = @transform_3, window_bounds = array<i64: 16, 128>}, {transform_indices = @transform_4, window_bounds = array<i64: 16, 128>}]} {
    %c0 = arith.constant 0 : index
    %0 = memref.load %arg1[%c0] : memref<1xf32, #tpu.memory_space<smem>>
    %c0_0 = arith.constant 0 : index
    %1 = memref.load %arg2[%c0_0] : memref<1xf32, #tpu.memory_space<smem>>
    %c0_1 = arith.constant 0 : index
    %2 = memref.load %arg3[%c0_1] : memref<1xf32, #tpu.memory_space<smem>>
    %c0_2 = arith.constant 0 : index
    %c0_3 = arith.constant 0 : index
    %3 = vector.load %arg4[%c0_2, %c0_3] : memref<16x128xf32, #tpu.memory_space<vmem>>, vector<16x128xf32>
    %4 = vector.broadcast %1 : f32 to vector<16x128xf32>
    %5 = arith.mulf %3, %4 : vector<16x128xf32>
    %6 = vector.broadcast %2 : f32 to vector<16x128xf32>
    %7 = arith.subf %5, %6 : vector<16x128xf32>
    %8 = math.absf %7 : vector<16x128xf32>
    %cst = arith.constant 5.000000e-01 : f32
    %9 = vector.broadcast %cst : f32 to vector<16x128xf32>
    %10 = arith.addf %8, %9 : vector<16x128xf32>
    %11 = math.floor %10 : vector<16x128xf32>
    %12 = tpu.bitcast %7 : vector<16x128xf32> -> vector<16x128xi32>
    %c-2147483648_i32 = arith.constant -2147483648 : i32
    %13 = vector.broadcast %c-2147483648_i32 : i32 to vector<16x128xi32>
    %14 = arith.andi %12, %13 : vector<16x128xi32>
    %15 = tpu.bitcast %11 : vector<16x128xf32> -> vector<16x128xi32>
    %16 = arith.ori %15, %14 : vector<16x128xi32>
    %17 = tpu.bitcast %16 : vector<16x128xi32> -> vector<16x128xf32>
    %cst_4 = arith.constant -1.280000e+02 : f32
    %cst_5 = arith.constant 1.270000e+02 : f32
    %18 = vector.broadcast %cst_4 : f32 to vector<16x128xf32>
    %19 = arith.maximumf %18, %17 : vector<16x128xf32>
    %20 = vector.broadcast %cst_5 : f32 to vector<16x128xf32>
    %21 = arith.minimumf %20, %19 : vector<16x128xf32>
    %22 = vector.broadcast %2 : f32 to vector<16x128xf32>
    %23 = arith.addf %21, %22 : vector<16x128xf32>
    %24 = vector.broadcast %0 : f32 to vector<16x128xf32>
    %25 = arith.mulf %23, %24 : vector<16x128xf32>
    %c0_6 = arith.constant 0 : index
    %c0_7 = arith.constant 0 : index
    %26 = vector.load %arg5[%c0_6, %c0_7] : memref<16x128xf32, #tpu.memory_space<vmem>>, vector<16x128xf32>
    tpu.vector_store %arg5[%c0_6, %c0_7], %25 {strides = array<i32>} : memref<16x128xf32, #tpu.memory_space<vmem>>, vector<16x128xf32>,
    return
  }
  func.func @transform_0(%arg0: i32) -> i32 {
    %c0_i32 = arith.constant 0 : i32
    %c0_i32_0 = arith.constant 0 : i32
    return %c0_i32 : i32
  }
  func.func @transform_1(%arg0: i32) -> i32 {
    %c0_i32 = arith.constant 0 : i32
    %c0_i32_0 = arith.constant 0 : i32
    return %c0_i32 : i32
  }
  func.func @transform_2(%arg0: i32) -> i32 {
    %c0_i32 = arith.constant 0 : i32
    %c0_i32_0 = arith.constant 0 : i32
    return %c0_i32 : i32
  }
  func.func @transform_3(%arg0: i32) -> (i32, i32) {
    %c0_i32 = arith.constant 0 : i32
    %c0_i32_0 = arith.constant 0 : i32
    return %arg0, %c0_i32 : i32, i32
  }
  func.func @transform_4(%arg0: i32) -> (i32, i32) {
    %c0_i32 = arith.constant 0 : i32
    %c0_i32_0 = arith.constant 0 : i32
    return %arg0, %c0_i32 : i32, i32
  }
}

</mosaic_0001>

<llo_original>
// kernel: tpu_custom_call.1
$region0: #{tpu_custom_call.1}
  #allocation0 [shape = 'u32[]', space=smem, size = 0x4, offset = 0x4, fixed_abs, tag = 'smem constant byte address 0x4 - core index']
  #allocation1 [shape = 'u32[144,128]{1,0:T(1,128)}', space=vmem, size = 0x12000, scoped, tag = 'internal scratch']
  #allocation2 [shape = 'f32[1]{0:T(128)S(6)}', space=smem, size = 0x200, scoped, tag = 'scoped memory for tpu_custom_call.1']
  #allocation3 [shape = 'f32[1]{0:T(128)S(6)}', space=smem, size = 0x200, scoped, tag = 'scoped memory for tpu_custom_call.1']
  #allocation4 [shape = 'f32[1]{0:T(128)S(6)}', space=smem, size = 0x200, scoped, tag = 'scoped memory for tpu_custom_call.1']
  %s0 = inlined_call_operand.<no memory space> [shape: f32[1], index: 0, kind: input, shape index: {}]
  %s1 = inlined_call_operand.<no memory space> [shape: f32[1], index: 1, kind: input, shape index: {}]
  %s2 = inlined_call_operand.<no memory space> [shape: f32[1], index: 2, kind: input, shape index: {}]
  %s3 = inlined_call_operand.hbm [shape: f32[16,128], index: 3, kind: input, shape index: {}]
  %s4 = inlined_call_operand.hbm [shape: f32[16,128], index: 4, kind: output, shape index: {}]
  %s5 = sld [smem:[#allocation0]]
  $region30: #{tpu_custom_call.1} parent=0
    _
  %s7 = ssub.s32 1, %s5
  %s8 = scalar_select 0, %s7, %s5
  %9 = sst [smem:[#allocation2]] %s0
  %10 = sst [smem:[#allocation3]] %s1
  %11 = sst [smem:[#allocation4]] %s2
  $region1: #{tpu_custom_call.1} parent=0
    #allocation5 [shape = 'u8[8192]{0}', space=vmem, size = 0x2000, scoped, tag = 'input window, operand 3, single buffered']
    #allocation6 [shape = 's32[1]{0}', space=sflag, size = 0x4, scoped, tag = 'scoped memory for tpu_custom_call.1']
    #allocation7 [shape = 's32[1]{0}', space=sflag, size = 0x4, scoped, tag = 'scoped memory for tpu_custom_call.1']
    #allocation8 [shape = 'u8[8192]{0}', space=vmem, size = 0x2000, scoped, tag = 'output window, operand 0, single buffered']
    %12 = vsyncpa [#allocation6], 0
    %13 = vsyncpa [#allocation7], 0
    // Predicated region
    $region2: #{tpu_custom_call.1} parent=1 // pred_check
      _
    $region3: #{tpu_custom_call.1} parent=1 // pred_check_branch
      %15 = sbr.rel (0) target = $region5
    $region4: #{tpu_custom_call.1} parent=1 // pred_region
      _
    $region5: #{tpu_custom_call.1} parent=1 // pred_fallthru
      _
    // Predicated region
    $region6: #{tpu_custom_call.1} parent=1 // pred_check
      _
    $region7: #{tpu_custom_call.1} parent=1 // pred_check_branch
      %17 = sbr.rel (0) target = $region9
    $region8: #{tpu_custom_call.1} parent=1 // pred_region
      _
    $region9: #{tpu_custom_call.1} parent=1 // pred_fallthru
      _
    // Predicated region
    $region10: #{tpu_custom_call.1} parent=1 // pred_check
      _
    $region11: #{tpu_custom_call.1} parent=1 // pred_check_branch
      %19 = sbr.rel (0) target = $region13
    $region12: #{tpu_custom_call.1} parent=1 // pred_region
      _
    $region13: #{tpu_custom_call.1} parent=1 // pred_fallthru
      _
    // Predicated region
    $region14: #{tpu_custom_call.1} parent=1 // pred_check
      _
    $region15: #{tpu_custom_call.1} parent=1 // pred_check_branch
      %21 = sbr.rel (0) target = $region17
    $region16: #{tpu_custom_call.1} parent=1 // pred_region
      %s23 = ssub.s32 256, 256
      %24 = vsyncadd [#allocation6], %s23
      %s25 = sshll.u32 [#allocation5], 4
      %s26 = int_to_ptr.vmem [resolvable:$true] %s25
      %31 = dma.hbm_to_vmem [thread:$0]  %s3, 256, %s26, [#allocation6], 128, 128, 8
    $region17: #{tpu_custom_call.1} parent=1 // pred_fallthru
      _
    // Predicated region
    $region18: #{tpu_custom_call.1} parent=1 // pred_check
      _
    $region19: #{tpu_custom_call.1} parent=1 // pred_check_branch
      %33 = sbr.rel (0) target = $region21
    $region20: #{tpu_custom_call.1} parent=1 // pred_region
      %34 = dma.done [#allocation6], 256
    $region21: #{tpu_custom_call.1} parent=1 // pred_fallthru
      _
    %s35 = sld [smem:[#allocation2]]
    %s36 = sld [smem:[#allocation3]]
    %s37 = sld [smem:[#allocation4]]
    %v38 = vld [vmem:[#allocation5] sm:$0xff]
    %v39 = vld [vmem:[#allocation5 + $0x8] sm:$0xff]
    %v40 = vstv %s36
    %v41 = vmul.f32 %v38, %v40
    %v42 = vmul.f32 %v39, %v40
    %v43 = vstv %s37
    %v44 = vsub.f32 %v41, %v43
    %v45 = vsub.f32 %v42, %v43
    %v46 = vand.u32 2147483647, %v44
    %v47 = vand.u32 2147483647, %v45
    %v48 = vadd.f32 %v46, 0.5
    %v49 = vadd.f32 %v47, 0.5
    %v50 = vfloor.f32 %v48
    %v51 = vfloor.f32 %v49
    %v54 = vand.u32 %v44, 2147483648
    %v55 = vand.u32 %v45, 2147483648
    %v58 = vor.u32 %v50, %v54
    %v59 = vor.u32 %v51, %v55
    %v62 = vmax.f32 %v58, -128.0
    %v63 = vmax.f32 %v59, -128.0
    %v64 = vmin.f32 %v62, 127.0
    %v65 = vmin.f32 %v63, 127.0
    %v66 = vadd.f32 %v64, %v43
    %v67 = vadd.f32 %v65, %v43
    %v68 = vstv %s35
    %v69 = vmul.f32 %v66, %v68
    %v70 = vmul.f32 %v67, %v68
    %71 = vst [vmem:[#allocation8] sm:$0xff] %v69
    %72 = vst [vmem:[#allocation8 + $0x8] sm:$0xff] %v70
    // Predicated region
    $region22: #{tpu_custom_call.1} parent=1 // pred_check
      _
    $region23: #{tpu_custom_call.1} parent=1 // pred_check_branch
      %74 = sbr.rel (0) target = $region25
    $region24: #{tpu_custom_call.1} parent=1 // pred_region
      %s76 = ssub.s32 256, 256
      %77 = vsyncadd [#allocation7], %s76
      %s78 = sshll.u32 [#allocation8], 4
      %s79 = int_to_ptr.vmem [resolvable:$true] %s78
      %84 = dma.vmem_to_hbm [thread:$0]  %s79, 256, %s4, [#allocation7], 128, 128, 8
    $region25: #{tpu_custom_call.1} parent=1 // pred_fallthru
      _
    // Predicated region
    $region26: #{tpu_custom_call.1} parent=1 // pred_check
      _
    $region27: #{tpu_custom_call.1} parent=1 // pred_check_branch
      %86 = sbr.rel (0) target = $region29
    $region28: #{tpu_custom_call.1} parent=1 // pred_region
      %87 = dma.done [#allocation7], 256
    $region29: #{tpu_custom_call.1} parent=1 // pred_fallthru
      _
    %88 = vsyncpa [#allocation6], 1
    %89 = vsyncpa [#allocation7], 1

</llo_original>
